<compile_context>
chip_gen: v5e
topology: v5e:2x2
jax: 0.10.0
libtpu: 0.0.40
codegen_flags: <defaults>
</compile_context>

<pallas_src>
import jax
import jax.numpy as jnp
from jax.experimental import pallas as pl
from jax.experimental.pallas import tpu as pltpu


# ---------------------------------------------------------------------------
# Fast path: one HBM->HBM DMA (no grid, no VMEM round-trip).
# ---------------------------------------------------------------------------
_SINGLE_DMA_MAX_BYTES = 64 * 1024 * 1024   # above this, use the pipelined path

# ---------------------------------------------------------------------------
# Fallback path: BlockSpec pipeline (very large tables only).
# ---------------------------------------------------------------------------
_MAX_BLOCK_BYTES = 8 * 1024 * 1024         # per-block cap (x4 when double-buffered)
_MAX_TILE_ROWS = 512                       # DMA win flattens out beyond ~512 rows
_VMEM_LIMIT_CAP = 56 * 1024 * 1024         # stays inside v7x's 64 MiB physical VMEM


def _sublane(itemsize):
    # Minimum second-minor tile: 8 rows for 4-byte, 16 for 2-byte, 32 for 1-byte.
    return max(8, 32 // itemsize)


def _single_dma_fwd(sl, emb_weight):
    """emb_weight[:sl] via one direct HBM->HBM async copy."""
    _, model_dim = emb_weight.shape

    def kernel(w_hbm, o_hbm, sem):
        # Rows [0, sl) of the table are contiguous in HBM; one DMA descriptor
        # moves them straight into the output buffer -- no VMEM staging.
        cp = pltpu.make_async_copy(w_hbm.at[pl.ds(0, sl), :], o_hbm, sem)
        cp.start()
        cp.wait()

    return pl.pallas_call(
        kernel,
        out_shape=jax.ShapeDtypeStruct((sl, model_dim), emb_weight.dtype),
        in_specs=[pl.BlockSpec(memory_space=pl.ANY)],
        out_specs=pl.BlockSpec(memory_space=pl.ANY),
        scratch_shapes=[pltpu.SemaphoreType.DMA],
    )(emb_weight)


def _choose_tiles(sl, model_dim, itemsize):
    """Largest lane-dense block fitting the VMEM block-byte cap."""
    sub = _sublane(itemsize)
    # Lane tile: full model_dim unless even one sublane-granule row slab
    # exceeds the block cap (pathologically wide rows) -> tile lanes too.
    tile_d = model_dim
    if sub * model_dim * itemsize > _MAX_BLOCK_BYTES:
        tile_d = max(128, (_MAX_BLOCK_BYTES // (sub * itemsize)) // 128 * 128)
    row_bytes = tile_d * itemsize
    rows_by_vmem = max(sub, (_MAX_BLOCK_BYTES // row_bytes) // sub * sub)
    sl_rounded = pl.cdiv(sl, sub) * sub
    tile_sl = min(_MAX_TILE_ROWS, rows_by_vmem, sl_rounded)
    return tile_sl, tile_d


def _pipelined_copy_kernel(w_ref, o_ref):
    # Pure copy of one (tile_sl, tile_d) block of the embedding table.
    o_ref[...] = w_ref[...]


def _pipelined_fwd(sl, emb_weight, tile_sl=None):
    """Tiled double-buffered copy; only used for > 64 MiB slices."""
    _, model_dim = emb_weight.shape
    itemsize = jnp.dtype(emb_weight.dtype).itemsize
    sub = _sublane(itemsize)

    auto_sl, tile_d = _choose_tiles(sl, model_dim, itemsize)
    if tile_sl is None:
        tile_sl = auto_sl
    else:
        tile_sl = max(sub, (int(tile_sl) // sub) * sub)

    grid = (pl.cdiv(sl, tile_sl), pl.cdiv(model_dim, tile_d))

    # Double-buffered in + out blocks ~= 4x block bytes; budget-derived limit
    # with a small headroom, clamped so it is always legal on v7x (64 MiB).
    block_bytes = tile_sl * tile_d * itemsize
    vmem_limit = int(min(_VMEM_LIMIT_CAP,
                         max(4 * block_bytes + (2 << 20), 4 << 20)))

    return pl.pallas_call(
        _pipelined_copy_kernel,
        out_shape=jax.ShapeDtypeStruct((sl, model_dim), emb_weight.dtype),
        grid_spec=pltpu.PrefetchScalarGridSpec(
            num_scalar_prefetch=0,
            grid=grid,
            # Identity index map realizes the arange(0, sl) gather tile by
            # tile; the ragged last row-tile is clipped by Pallas.
            in_specs=[pl.BlockSpec((tile_sl, tile_d), lambda i, j: (i, j))],
            out_specs=pl.BlockSpec((tile_sl, tile_d), lambda i, j: (i, j)),
        ),
        compiler_params=pltpu.CompilerParams(
            dimension_semantics=("parallel", "parallel"),
            vmem_limit_bytes=vmem_limit,
        ),
    )(emb_weight)


def learned_position_embeddings_fwd(x, emb_weight, *, force_pipelined=False,
                                    tile_sl=None):
    """Returns emb_weight[0:x.shape[1], :] computed via a Pallas kernel.

    x:          (batch, sl) array -- only its static seq length is used,
                exactly as in the PyTorch module.
    emb_weight: (seq_len, model_dim) learned position table.
    """
    sl = int(x.shape[1])
    seq_len, model_dim = emb_weight.shape
    assert sl <= seq_len, "sequence longer than learned position table"

    itemsize = jnp.dtype(emb_weight.dtype).itemsize
    copy_bytes = sl * model_dim * itemsize
    if force_pipelined or copy_bytes > _SINGLE_DMA_MAX_BYTES:
        return _pipelined_fwd(sl, emb_weight, tile_sl=tile_sl)
    return _single_dma_fwd(sl, emb_weight)


def get_fixed_embedding(ind, emb_weight):
    # Matches: self.emb(torch.tensor([ind])).unsqueeze(0) -> (1, 1, model_dim).
    return emb_weight[ind][None, None, :]


def init_learned_position_embeddings(key, seq_len, model_dim, init=0.02):
    # Matches: self.emb.weight.data.normal_(mean=0.0, std=init)
    # (keep model_dim a multiple of 128 at init so stores stay lane-dense).
    return (init * jax.random.normal(key, (seq_len, model_dim))).astype(jnp.float32)


if __name__ == "__main__":
    key = jax.random.PRNGKey(0)
    k_w, k_x, k_w2 = jax.random.split(key, 3)

    # Small shapes consistent with the module.
    seq_len, model_dim = 16, 128     # max learned positions, hidden size
    batch, sl = 2, 8                 # actual sequence length of x

    emb_weight = init_learned_position_embeddings(k_w, seq_len, model_dim)
    # x: token ids (values unused by forward, only its shape[1] matters)
    x = jax.random.randint(k_x, (batch, sl), 0, seq_len, dtype=jnp.int32)

    out = jax.block_until_ready(learned_position_embeddings_fwd(x, emb_weight))
    ref = emb_weight[:sl, :]
    assert out.shape == (sl, model_dim)
    assert out.dtype == emb_weight.dtype
    assert jnp.array_equal(out, ref)

    # Ragged sl (not a multiple of the sublane granule) on the single-DMA
    # fast path ...
    seq_len2, model_dim2, sl2 = 40, 256, 20
    emb_weight2 = init_learned_position_embeddings(k_w2, seq_len2, model_dim2)
    x2 = jnp.zeros((batch, sl2), dtype=jnp.int32)
    out2 = jax.block_until_ready(learned_position_embeddings_fwd(x2, emb_weight2))
    assert out2.shape == (sl2, model_dim2)
    assert jnp.array_equal(out2, emb_weight2[:sl2, :])

    # ... and on the pipelined fallback (exercises cdiv grid + edge clipping).
    out3 = jax.block_until_ready(
        learned_position_embeddings_fwd(x2, emb_weight2, force_pipelined=True))
    assert jnp.array_equal(out3, emb_weight2[:sl2, :])

    # get_fixed_embedding sanity check.
    fixed = get_fixed_embedding(3, emb_weight)
    assert fixed.shape == (1, 1, model_dim)
    assert jnp.array_equal(fixed[0, 0], emb_weight[3])

    print("KERNEL_OK")
</pallas_src>

<mosaic_0001>
module attributes {stable_mosaic.version = 11 : i64} {
  func.func @kernel(%arg0: memref<16x128xf32, #tpu.memory_space<any>>, %arg1: memref<8x128xf32, #tpu.memory_space<any>>, %arg2: memref<!tpu.dma_semaphore, #tpu.memory_space<semaphore_mem>>) attributes {dimension_semantics = [], scalar_prefetch = 0 : i64, scratch_operands = 1 : i64, tpu.core_type = #tpu.core_type<tc>} {
    %c0_i32 = arith.constant 0 : i32
    %c0_i32_0 = arith.constant 0 : i32
    %0 = tpu.memref_slice %arg0[%c0_i32, %c0_i32_0] : memref<16x128xf32, #tpu.memory_space<any>> -> memref<8x128xf32, #tpu.memory_space<any>>
    tpu.enqueue_dma source(%0 : memref<8x128xf32, #tpu.memory_space<any>>) target(%arg1 : memref<8x128xf32, #tpu.memory_space<any>>) target_semaphore(%arg2 : memref<!tpu.dma_semaphore, #tpu.memory_space<semaphore_mem>>)
    %c0_i32_1 = arith.constant 0 : i32
    %c0_i32_2 = arith.constant 0 : i32
    %1 = tpu.memref_slice %arg0[%c0_i32_1, %c0_i32_2] : memref<16x128xf32, #tpu.memory_space<any>> -> memref<8x128xf32, #tpu.memory_space<any>>
    tpu.wait_dma2 semaphore(%arg2 : memref<!tpu.dma_semaphore, #tpu.memory_space<semaphore_mem>>) src(%1 : memref<8x128xf32, #tpu.memory_space<any>>) dst(%arg1 : memref<8x128xf32, #tpu.memory_space<any>>)
    return
  }
}

</mosaic_0001>

<llo_original>
// kernel: tpu_custom_call.1
$region0: #{tpu_custom_call.1}
  #allocation0 [shape = 'u32[]', space=smem, size = 0x4, offset = 0x4, fixed_abs, tag = 'smem constant byte address 0x4 - core index']
  #allocation1 [shape = 'u32[72,128]{1,0:T(1,128)}', space=vmem, size = 0x9000, scoped, tag = 'internal scratch']
  #allocation2 [shape = 's32[1]{0}', space=sflag, size = 0x4, scoped, tag = 'scratch operand']
  #allocation3 [shape = 's32[]', space=sflag, size = 0x4, offset = 0, fixed_abs, tag = 'sflag constant byte address 0x0 - dummy sync flag']
  #allocation4 [shape = 'u32[0]{0}', space=smem, size = 0, offset = 0, fixed_abs, tag = 'smem constant byte address 0x0 - null']
  %s0 = inlined_call_operand.hbm [shape: f32[16,128], index: 0, kind: input, shape index: {}]
  %s1 = inlined_call_operand.hbm [shape: f32[8,128], index: 1, kind: output, shape index: {}]
  %s2 = sld [smem:[#allocation0]]
  $region2: #{tpu_custom_call.1} parent=0
    _
  %s4 = ssub.s32 1, %s2
  %s5 = scalar_select 0, %s4, %s2
  %s7 = sshll.u32 1, 14
  %s8 = sxor.u32 4294967295, %s7
  %s10 = sshll.u32 %s0, 4
  %s11 = int_to_ptr.hbm [resolvable:$true] %s10
  %s12 = sshll.u32 %s1, 4
  %s13 = int_to_ptr.hbm [resolvable:$true] %s12
  %16 = dma.general %s11, 128, %s13, [#allocation2], [#allocation3], [#allocation4], 0, 0
  %s17 = smul.u32 8, 1
  %s18 = sshll.u32 %s17, 4
  %19 = dma.done [#allocation2], %s18
  %20 = vsyncmov [#allocation2]
  %s21 = vpop.sfrf %20
  %p22 = scmp.eq.s32.totalorder %s21, 0
  %p23 = pneg %p22
  %25 = shalt.err (%p23)

</llo_original>
